<compile_context>
chip_gen: v6e
topology: v6e:2x2x1
jax: 0.10.0
libtpu: 0.0.40
codegen_flags: <defaults>
</compile_context>

<pallas_src>
import functools

import jax
import jax.numpy as jnp
from jax import lax
from jax.experimental import pallas as pl
from jax.experimental.pallas import tpu as pltpu

_LANE = 128
_SUB = 8
_CHUNK_ROWS = 512                      # in-kernel sub-tile (bounds VMEM temps)


def _round_up(x, m):
    return ((x + m - 1) // m) * m


@functools.lru_cache(maxsize=None)
def _device_kind():
    try:
        return jax.devices()[0].device_kind.lower()
    except Exception:
        return ""


def _num_tensorcores():
    # Only v7x has 2 TensorCores per chip; the 2-way core split is pure
    # overhead (serial loop + ragged path) on single-TC v5e/v6e.
    kind = _device_kind()
    return 2 if ("v7" in kind or "7x" in kind) else 1


def _bf16_compute_ok():
    # v6e/v7x have bf16 VPU + EUP; v5e (and older) do not -> keep f32 there.
    kind = _device_kind()
    return any(t in kind for t in ("v6", "v7", "7x"))


def _vmem_limit_bytes():
    kind = _device_kind()
    if any(t in kind for t in ("v5", "v6", "v7", "7x")):
        return 32 * 1024 * 1024        # within scoped/physical limits everywhere
    return 16 * 1024 * 1024            # conservative for unknown chips


def _make_kernel(*, block_rows, chunk_rows, n, nb, steps, need_mask, ragged,
                 compute_dtype):
    full_rows = n // _LANE             # rows that are entirely valid
    rem = n - full_rows * _LANE        # valid lanes in the (partial) last row
    n_chunks = block_rows // chunk_rows

    def kernel(p_ref, t_ref, inter_out, denom_out, inter_acc, sum_acc):
        c = pl.program_id(0)           # core (parallel) index
        s = pl.program_id(1)           # step along the reduction axis
        b = c * steps + s              # global row-block index

        @pl.when(s == 0)
        def _():
            inter_acc[...] = jnp.zeros_like(inter_acc)
            sum_acc[...] = jnp.zeros_like(sum_acc)

        def chunk_fold(r0, masked):
            # One (chunk_rows, 128) sub-tile -> two (8, 128) f32 partials.
            half = jnp.asarray(0.5, compute_dtype)
            x = p_ref[pl.ds(r0, chunk_rows), :].astype(compute_dtype)
            t = t_ref[pl.ds(r0, chunk_rows), :].astype(compute_dtype)
            # Single-transcendental sigmoid: sigmoid(x) = 0.5*tanh(0.5*x)+0.5.
            p = half * jnp.tanh(half * x) + half
            pt = p * t
            ps = p + t
            if masked:
                # Only ever executed for b == nb - 1, so the row base is static.
                row = ((nb - 1) * block_rows + r0
                       + lax.broadcasted_iota(jnp.int32, (chunk_rows, _LANE), 0))
                col = lax.broadcasted_iota(jnp.int32, (chunk_rows, _LANE), 1)
                valid = (row < full_rows) | ((row == full_rows) & (col < rem))
                zero = jnp.zeros((), compute_dtype)
                pt = jnp.where(valid, pt, zero)
                ps = jnp.where(valid, ps, zero)
            # Sublane fold: widen to f32, reshape (chunk,128)->(chunk//8,8,128)
            # and sum over the leading axis -- pure VPU vreg adds, no XLU.
            pt = pt.astype(jnp.float32).reshape(chunk_rows // _SUB, _SUB, _LANE)
            ps = ps.astype(jnp.float32).reshape(chunk_rows // _SUB, _SUB, _LANE)
            return jnp.sum(pt, axis=0), jnp.sum(ps, axis=0)

        def accumulate(masked):
            def body():
                inter_part = jnp.zeros((_SUB, _LANE), jnp.float32)
                sum_part = jnp.zeros((_SUB, _LANE), jnp.float32)
                for ci in range(n_chunks):         # static, fully unrolled
                    ip, sp = chunk_fold(ci * chunk_rows, masked)
                    inter_part = inter_part + ip
                    sum_part = sum_part + sp
                # One 4 KiB accumulator RMW per grid step (vs. full-tile RMW).
                inter_acc[...] += inter_part
                sum_acc[...] += sum_part
            return body

        if need_mask:
            # Only the last real block pays for mask generation.
            pl.when(b < nb - 1)(accumulate(False))
            pl.when(b == nb - 1)(accumulate(True))
        elif ragged:
            # Clamped duplicate block (index past the last real block): skip.
            pl.when(b < nb)(accumulate(False))
        else:
            accumulate(False)()

        @pl.when(s == steps - 1)
        def _():
            # The only cross-lane (XLU) reduction: once per core.
            inter_out[...] = jnp.full((1, 1, 1), jnp.sum(inter_acc[...]),
                                      dtype=jnp.float32)
            denom_out[...] = jnp.full((1, 1, 1), jnp.sum(sum_acc[...]),
                                      dtype=jnp.float32)

    return kernel


def dice_loss(pred, target, *, block_rows=None):
    """Pallas TPU implementation of DiceLoss.forward(pred, target)."""
    assert pred.shape == target.shape
    n = pred.size
    rows = pl.cdiv(n, _LANE)

    # Lane-dense 2D slabs in the caller's dtype (only a <128-element tail pad).
    # The cast to the compute dtype happens in-kernel, in VMEM, so HBM traffic
    # stays at the input dtype.
    p_flat = pred.reshape(-1)
    t_flat = target.reshape(-1)
    pad = rows * _LANE - n
    if pad:
        p_flat = jnp.pad(p_flat, (0, pad))
        t_flat = jnp.pad(t_flat, (0, pad))
    p2d = p_flat.reshape(rows, _LANE)
    t2d = t_flat.reshape(rows, _LANE)

    ips = jnp.dtype(pred.dtype).itemsize
    its = jnp.dtype(target.dtype).itemsize
    vmem_limit = _vmem_limit_bytes()

    if block_rows is None:
        # Large tiles amortize the ~0.35us per-grid-step overhead; keep the
        # double-buffered input windows to ~half the scoped-VMEM limit.
        budget = vmem_limit // 2
        block_rows = min(8192, budget // (2 * _LANE * (ips + its)))

    br = max(_SUB, (block_rows // _SUB) * _SUB)
    br = min(br, _round_up(rows, _SUB))
    if br >= _CHUNK_ROWS:
        br = (br // _CHUNK_ROWS) * _CHUNK_ROWS
        chunk = _CHUNK_ROWS
    else:
        chunk = br

    nb = pl.cdiv(rows, br)                 # number of row blocks
    nc = _num_tensorcores()                # 2 only on v7x
    if nb < nc:
        nc = 1
    steps = pl.cdiv(nb, nc)
    ragged = nb != nc * steps              # some (c, s) map past the last block
    need_mask = (nb * br != rows) or (n % _LANE != 0)

    bf16 = jnp.dtype(jnp.bfloat16)
    compute_dtype = (jnp.bfloat16
                     if (jnp.dtype(pred.dtype) == bf16
                         and jnp.dtype(target.dtype) == bf16
                         and _bf16_compute_ok())
                     else jnp.float32)

    def in_idx(c, s):
        # Clamp keeps the DMA in-bounds for the ragged case; the kernel skips
        # the (masked-out) duplicate block's contribution.
        return (jnp.minimum(c * steps + s, nb - 1), 0)

    kernel = _make_kernel(block_rows=br, chunk_rows=chunk, n=n, nb=nb,
                          steps=steps, need_mask=need_mask, ragged=ragged,
                          compute_dtype=compute_dtype)

    bytes_accessed = int(p2d.size * ips + t2d.size * its + 8 * nc)
    cost = pl.CostEstimate(flops=6 * n, transcendentals=n,
                           bytes_accessed=bytes_accessed)

    inter_parts, denom_parts = pl.pallas_call(
        kernel,
        out_shape=(
            jax.ShapeDtypeStruct((nc, 1, 1), jnp.float32),
            jax.ShapeDtypeStruct((nc, 1, 1), jnp.float32),
        ),
        grid_spec=pltpu.PrefetchScalarGridSpec(
            num_scalar_prefetch=0,
            grid=(nc, steps),
            in_specs=[
                pl.BlockSpec((br, _LANE), in_idx),
                pl.BlockSpec((br, _LANE), in_idx),
            ],
            out_specs=(
                pl.BlockSpec((1, 1, 1), lambda c, s: (c, 0, 0)),
                pl.BlockSpec((1, 1, 1), lambda c, s: (c, 0, 0)),
            ),
            scratch_shapes=[
                pltpu.VMEM((_SUB, _LANE), jnp.float32),   # intersection partial
                pltpu.VMEM((_SUB, _LANE), jnp.float32),   # sum(p)+sum(t) partial
            ],
        ),
        compiler_params=pltpu.CompilerParams(
            dimension_semantics=("parallel", "arbitrary"),
            vmem_limit_bytes=vmem_limit,
        ),
        cost_estimate=cost,
    )(p2d, t2d)

    # Combine the per-core partials (a handful of scalars) in plain JAX.
    smooth = jnp.float32(1.0)
    intersection = jnp.sum(inter_parts)
    denom = jnp.sum(denom_parts)
    dice = (2.0 * intersection + smooth) / (denom + smooth)
    return 1.0 - dice


def _reference(pred, target):
    p = jax.nn.sigmoid(pred.astype(jnp.float32))
    t = target.astype(jnp.float32)
    smooth = 1.0
    inter = jnp.sum(p * t)
    dice = (2.0 * inter + smooth) / (jnp.sum(p) + jnp.sum(t) + smooth)
    return 1.0 - dice


if __name__ == "__main__":
    key = jax.random.PRNGKey(0)

    # Primary shape implied by the module: NCHW batch=2, channels=4, 16x16.
    k1, k2 = jax.random.split(key)
    pred = jax.random.normal(k1, (2, 4, 16, 16), dtype=jnp.float32)
    target = (jax.random.uniform(k2, (2, 4, 16, 16)) > 0.5).astype(jnp.float32)

    loss = jax.block_until_ready(dice_loss(pred, target))
    ref = jax.block_until_ready(_reference(pred, target))
    assert jnp.allclose(loss, ref, atol=1e-5, rtol=1e-5), (loss, ref)

    # Multi-block grids exercising the masked-tail fast/slow split, the ragged
    # clamped-block path (on v7x) and multi-step accumulation.
    k3, k4 = jax.random.split(k1)
    pred2 = jax.random.normal(k3, (2, 4, 32, 40), dtype=jnp.float32)
    target2 = (jax.random.uniform(k4, (2, 4, 32, 40)) > 0.5).astype(jnp.float32)
    for br in (32, 24):
        l2 = jax.block_until_ready(dice_loss(pred2, target2, block_rows=br))
        r2 = jax.block_until_ready(_reference(pred2, target2))
        assert jnp.allclose(l2, r2, atol=1e-5, rtol=1e-5), (br, l2, r2)

    # bf16 inputs + element count not a multiple of 128 (wrapper tail pad,
    # in-kernel tail mask, bf16 compute path on v6e/v7x).
    k5, k6 = jax.random.split(k2)
    pred3 = jax.random.normal(k5, (3, 5, 7, 11), dtype=jnp.bfloat16)
    target3 = (jax.random.uniform(k6, (3, 5, 7, 11)) > 0.5).astype(jnp.bfloat16)
    l3 = jax.block_until_ready(dice_loss(pred3, target3))
    r3 = jax.block_until_ready(_reference(pred3, target3))
    assert jnp.allclose(l3, r3, atol=3e-3, rtol=3e-3), (l3, r3)

    print("KERNEL_OK")
</pallas_src>

<mosaic_0001>
module attributes {stable_mosaic.version = 11 : i64} {
  func.func @kernel(%arg0: i32, %arg1: i32, %arg2: memref<16x128xf32, #tpu.memory_space<vmem>>, %arg3: memref<16x128xf32, #tpu.memory_space<vmem>>, %arg4: memref<1x1x1xf32, #tpu.memory_space<vmem>>, %arg5: memref<1x1x1xf32, #tpu.memory_space<vmem>>, %arg6: memref<8x128xf32, #tpu.memory_space<vmem>>, %arg7: memref<8x128xf32, #tpu.memory_space<vmem>>) attributes {dimension_semantics = [#tpu.dimension_semantics<parallel>, #tpu.dimension_semantics<arbitrary>], iteration_bounds = array<i64: 1, 1>, scalar_prefetch = 0 : i64, scratch_operands = 2 : i64, tpu.core_type = #tpu.core_type<tc>, window_params = [{transform_indices = @transform_0, window_bounds = array<i64: 16, 128>}, {transform_indices = @transform_1, window_bounds = array<i64: 16, 128>}, {transform_indices = @transform_2, window_bounds = array<i64: 1, 1, 1>}, {transform_indices = @transform_3, window_bounds = array<i64: 1, 1, 1>}]} {
    %c0_i32 = arith.constant 0 : i32
    %0 = arith.cmpi eq, %arg1, %c0_i32 : i32
    %1 = arith.extui %0 : i1 to i32
    %c0_i32_0 = arith.constant 0 : i32
    %2 = arith.cmpi ne, %1, %c0_i32_0 : i32
    scf.if %2 {
      %cst_20 = arith.constant 0.000000e+00 : f32
      %31 = vector.broadcast %cst_20 : f32 to vector<8x128xf32>
      %c0_21 = arith.constant 0 : index
      %c0_22 = arith.constant 0 : index
      %32 = vector.load %arg6[%c0_21, %c0_22] : memref<8x128xf32, #tpu.memory_space<vmem>>, vector<8x128xf32>
      tpu.vector_store %arg6[%c0_21, %c0_22], %31 {strides = array<i32>} : memref<8x128xf32, #tpu.memory_space<vmem>>, vector<8x128xf32>,
      %cst_23 = arith.constant 0.000000e+00 : f32
      %33 = vector.broadcast %cst_23 : f32 to vector<8x128xf32>
      %c0_24 = arith.constant 0 : index
      %c0_25 = arith.constant 0 : index
      %34 = vector.load %arg7[%c0_24, %c0_25] : memref<8x128xf32, #tpu.memory_space<vmem>>, vector<8x128xf32>
      tpu.vector_store %arg7[%c0_24, %c0_25], %33 {strides = array<i32>} : memref<8x128xf32, #tpu.memory_space<vmem>>, vector<8x128xf32>,
    } else {
    }
    %cst = arith.constant 0.000000e+00 : f32
    %3 = vector.broadcast %cst : f32 to vector<8x128xf32>
    %cst_1 = arith.constant 0.000000e+00 : f32
    %4 = vector.broadcast %cst_1 : f32 to vector<8x128xf32>
    %c0 = arith.constant 0 : index
    %c0_2 = arith.constant 0 : index
    %5 = vector.load %arg2[%c0, %c0_2] : memref<16x128xf32, #tpu.memory_space<vmem>>, vector<16x128xf32>
    %c0_3 = arith.constant 0 : index
    %c0_4 = arith.constant 0 : index
    %6 = vector.load %arg3[%c0_3, %c0_4] : memref<16x128xf32, #tpu.memory_space<vmem>>, vector<16x128xf32>
    %cst_5 = arith.constant 5.000000e-01 : f32
    %7 = vector.broadcast %cst_5 : f32 to vector<16x128xf32>
    %8 = arith.mulf %7, %5 : vector<16x128xf32>
    %9 = math.tanh %8 : vector<16x128xf32>
    %cst_6 = arith.constant 5.000000e-01 : f32
    %10 = vector.broadcast %cst_6 : f32 to vector<16x128xf32>
    %11 = arith.mulf %10, %9 : vector<16x128xf32>
    %cst_7 = arith.constant 5.000000e-01 : f32
    %12 = vector.broadcast %cst_7 : f32 to vector<16x128xf32>
    %13 = arith.addf %11, %12 : vector<16x128xf32>
    %14 = arith.mulf %13, %6 : vector<16x128xf32>
    %15 = arith.addf %13, %6 : vector<16x128xf32>
    %16 = vector.shape_cast %14 : vector<16x128xf32> to vector<2x8x128xf32>
    %17 = vector.shape_cast %15 : vector<16x128xf32> to vector<2x8x128xf32>
    %cst_8 = arith.constant dense<0.000000e+00> : vector<8x128xf32>
    %18 = vector.multi_reduction <add>, %16, %cst_8 [0] : vector<2x8x128xf32> to vector<8x128xf32>
    %cst_9 = arith.constant dense<0.000000e+00> : vector<8x128xf32>
    %19 = vector.multi_reduction <add>, %17, %cst_9 [0] : vector<2x8x128xf32> to vector<8x128xf32>
    %20 = arith.addf %3, %18 : vector<8x128xf32>
    %21 = arith.addf %4, %19 : vector<8x128xf32>
    %c0_10 = arith.constant 0 : index
    %c0_11 = arith.constant 0 : index
    %22 = vector.load %arg6[%c0_10, %c0_11] : memref<8x128xf32, #tpu.memory_space<vmem>>, vector<8x128xf32>
    %23 = arith.addf %22, %20 : vector<8x128xf32>
    %c0_12 = arith.constant 0 : index
    %c0_13 = arith.constant 0 : index
    %24 = vector.load %arg6[%c0_12, %c0_13] : memref<8x128xf32, #tpu.memory_space<vmem>>, vector<8x128xf32>
    tpu.vector_store %arg6[%c0_12, %c0_13], %23 {strides = array<i32>} : memref<8x128xf32, #tpu.memory_space<vmem>>, vector<8x128xf32>,
    %c0_14 = arith.constant 0 : index
    %c0_15 = arith.constant 0 : index
    %25 = vector.load %arg7[%c0_14, %c0_15] : memref<8x128xf32, #tpu.memory_space<vmem>>, vector<8x128xf32>
    %26 = arith.addf %25, %21 : vector<8x128xf32>
    %c0_16 = arith.constant 0 : index
    %c0_17 = arith.constant 0 : index
    %27 = vector.load %arg7[%c0_16, %c0_17] : memref<8x128xf32, #tpu.memory_space<vmem>>, vector<8x128xf32>
    tpu.vector_store %arg7[%c0_16, %c0_17], %26 {strides = array<i32>} : memref<8x128xf32, #tpu.memory_space<vmem>>, vector<8x128xf32>,
    %c0_i32_18 = arith.constant 0 : i32
    %28 = arith.cmpi eq, %arg1, %c0_i32_18 : i32
    %29 = arith.extui %28 : i1 to i32
    %c0_i32_19 = arith.constant 0 : i32
    %30 = arith.cmpi ne, %29, %c0_i32_19 : i32
    scf.if %30 {
      %c0_20 = arith.constant 0 : index
      %c0_21 = arith.constant 0 : index
      %31 = vector.load %arg6[%c0_20, %c0_21] : memref<8x128xf32, #tpu.memory_space<vmem>>, vector<8x128xf32>
      %32 = vector.shape_cast %31 : vector<8x128xf32> to vector<1x8x128xf32>
      %cst_22 = arith.constant dense<0.000000e+00> : vector<1xf32>
      %33 = vector.multi_reduction <add>, %32, %cst_22 [1, 2] : vector<1x8x128xf32> to vector<1xf32>
      %34 = vector.shape_cast %33 : vector<1xf32> to vector<1x1x1xf32>
      %35 = vector.extract %34[0, 0, 0] : f32 from vector<1x1x1xf32>
      %36 = vector.broadcast %35 : f32 to vector<1x1x1xf32>
      %c0_23 = arith.constant 0 : index
      %c0_24 = arith.constant 0 : index
      %c0_25 = arith.constant 0 : index
      %37 = vector.load %arg4[%c0_23, %c0_24, %c0_25] : memref<1x1x1xf32, #tpu.memory_space<vmem>>, vector<1x1x1xf32>
      tpu.vector_store %arg4[%c0_23, %c0_24, %c0_25], %36 {strides = array<i32>} : memref<1x1x1xf32, #tpu.memory_space<vmem>>, vector<1x1x1xf32>,
      %c0_26 = arith.constant 0 : index
      %c0_27 = arith.constant 0 : index
      %38 = vector.load %arg7[%c0_26, %c0_27] : memref<8x128xf32, #tpu.memory_space<vmem>>, vector<8x128xf32>
      %39 = vector.shape_cast %38 : vector<8x128xf32> to vector<1x8x128xf32>
      %cst_28 = arith.constant dense<0.000000e+00> : vector<1xf32>
      %40 = vector.multi_reduction <add>, %39, %cst_28 [1, 2] : vector<1x8x128xf32> to vector<1xf32>
      %41 = vector.shape_cast %40 : vector<1xf32> to vector<1x1x1xf32>
      %42 = vector.extract %41[0, 0, 0] : f32 from vector<1x1x1xf32>
      %43 = vector.broadcast %42 : f32 to vector<1x1x1xf32>
      %c0_29 = arith.constant 0 : index
      %c0_30 = arith.constant 0 : index
      %c0_31 = arith.constant 0 : index
      %44 = vector.load %arg5[%c0_29, %c0_30, %c0_31] : memref<1x1x1xf32, #tpu.memory_space<vmem>>, vector<1x1x1xf32>
      tpu.vector_store %arg5[%c0_29, %c0_30, %c0_31], %43 {strides = array<i32>} : memref<1x1x1xf32, #tpu.memory_space<vmem>>, vector<1x1x1xf32>,
    } else {
    }
    return
  }
  func.func @transform_0(%arg0: i32, %arg1: i32) -> (i32, i32) {
    %c1_i32 = arith.constant 1 : i32
    %0 = arith.muli %arg0, %c1_i32 : i32
    %1 = arith.addi %0, %arg1 : i32
    %c0_i32 = arith.constant 0 : i32
    %2 = arith.minsi %1, %c0_i32 : i32
    %c0_i32_0 = arith.constant 0 : i32
    %c0_i32_1 = arith.constant 0 : i32
    return %2, %c0_i32_0 : i32, i32
  }
  func.func @transform_1(%arg0: i32, %arg1: i32) -> (i32, i32) {
    %c1_i32 = arith.constant 1 : i32
    %0 = arith.muli %arg0, %c1_i32 : i32
    %1 = arith.addi %0, %arg1 : i32
    %c0_i32 = arith.constant 0 : i32
    %2 = arith.minsi %1, %c0_i32 : i32
    %c0_i32_0 = arith.constant 0 : i32
    %c0_i32_1 = arith.constant 0 : i32
    return %2, %c0_i32_0 : i32, i32
  }
  func.func @transform_2(%arg0: i32, %arg1: i32) -> (i32, i32, i32) {
    %c0_i32 = arith.constant 0 : i32
    %c0_i32_0 = arith.constant 0 : i32
    %c0_i32_1 = arith.constant 0 : i32
    return %arg0, %c0_i32, %c0_i32_0 : i32, i32, i32
  }
  func.func @transform_3(%arg0: i32, %arg1: i32) -> (i32, i32, i32) {
    %c0_i32 = arith.constant 0 : i32
    %c0_i32_0 = arith.constant 0 : i32
    %c0_i32_1 = arith.constant 0 : i32
    return %arg0, %c0_i32, %c0_i32_0 : i32, i32, i32
  }
}

</mosaic_0001>

<llo_original>
// kernel: tpu_custom_call.1
$region0: #{tpu_custom_call.1}
  #allocation0 [shape = 'u32[]', space=smem, size = 0x4, offset = 0x4, fixed_abs, tag = 'smem constant byte address 0x4 - core index']
  #allocation1 [shape = 'u32[144,128]{1,0:T(1,128)}', space=vmem, size = 0x12000, scoped, tag = 'internal scratch']
  #allocation2 [shape = 'f32[8,128]{1,0:T(8,128)}', space=vmem, size = 0x1000, scoped, tag = 'scratch operand']
  #allocation3 [shape = 'f32[8,128]{1,0:T(8,128)}', space=vmem, size = 0x1000, scoped, tag = 'scratch operand']
  %s0 = inlined_call_operand.hbm [shape: f32[16,128], index: 0, kind: input, shape index: {}]
  %s1 = inlined_call_operand.hbm [shape: f32[16,128], index: 1, kind: input, shape index: {}]
  %s2 = inlined_call_operand.hbm [shape: f32[1,1,1], index: 2, kind: output, shape index: {0}]
  %s3 = inlined_call_operand.hbm [shape: f32[1,1,1], index: 3, kind: output, shape index: {1}]
  %4 = xla_tuple %s2, %s3
  %s5 = sld [smem:[#allocation0]]
  $region42: #{tpu_custom_call.1} parent=0
    _
  %s7 = ssub.s32 1, %s5
  %s8 = scalar_select 0, %s7, %s5
  $region1: #{tpu_custom_call.1} parent=0
    #allocation4 [shape = 'u8[8192]{0}', space=vmem, size = 0x2000, scoped, tag = 'input window, operand 0, single buffered']
    #allocation5 [shape = 's32[1]{0}', space=sflag, size = 0x4, scoped, tag = 'scoped memory for tpu_custom_call.1']
    #allocation6 [shape = 's32[1]{0}', space=sflag, size = 0x4, scoped, tag = 'scoped memory for tpu_custom_call.1']
    #allocation7 [shape = 'u8[8192]{0}', space=vmem, size = 0x2000, scoped, tag = 'input window, operand 1, single buffered']
    #allocation8 [shape = 's32[1]{0}', space=sflag, size = 0x4, scoped, tag = 'scoped memory for tpu_custom_call.1']
    #allocation9 [shape = 'u8[512]{0}', space=vmem, size = 0x400, scoped, tag = 'output window, operand 0, single buffered']
    #allocation10 [shape = 'u8[512]{0}', space=vmem, size = 0x400, scoped, tag = 'output window, operand 1, single buffered']
    #allocation11 [shape = 's32[1]{0}', space=sflag, size = 0x4, scoped, tag = 'scoped memory for tpu_custom_call.1']
    %9 = vsyncpa [#allocation5], 0
    %10 = vsyncpa [#allocation8], 0
    %11 = vsyncpa [#allocation6], 0
    %12 = vsyncpa [#allocation11], 0
    // Predicated region
    $region2: #{tpu_custom_call.1} parent=1 // pred_check
      _
    $region3: #{tpu_custom_call.1} parent=1 // pred_check_branch
      %14 = sbr.rel (0) target = $region5
    $region4: #{tpu_custom_call.1} parent=1 // pred_region
      %s15 = sadd.s32 0, 0
      %p16 = scmp.lt.s32.totalorder %s15, 0
      %s17 = scalar_select %p16, %s15, 0
      %s18 = smul.u32 2, %s17
      %s20 = ssub.s32 256, 256
      %21 = vsyncadd [#allocation5], %s20
      %s22 = smul.addr %s18, 128
      %s23 = scalar_lea.hbm %s0, %s22
      %s24 = sshll.u32 [#allocation4], 4
      %s25 = int_to_ptr.vmem [resolvable:$true] %s24
      %30 = dma.hbm_to_vmem [thread:$0]  %s23, 256, %s25, [#allocation5], 128, 128, 8
    $region5: #{tpu_custom_call.1} parent=1 // pred_fallthru
      _
    // Predicated region
    $region6: #{tpu_custom_call.1} parent=1 // pred_check
      _
    $region7: #{tpu_custom_call.1} parent=1 // pred_check_branch
      %32 = sbr.rel (0) target = $region9
    $region8: #{tpu_custom_call.1} parent=1 // pred_region
      %s33 = sadd.s32 0, 0
      %p34 = scmp.lt.s32.totalorder %s33, 0
      %s35 = scalar_select %p34, %s33, 0
      %s36 = smul.u32 2, %s35
      %s38 = ssub.s32 256, 256
      %39 = vsyncadd [#allocation8], %s38
      %s40 = smul.addr %s36, 128
      %s41 = scalar_lea.hbm %s1, %s40
      %s42 = sshll.u32 [#allocation7], 4
      %s43 = int_to_ptr.vmem [resolvable:$true] %s42
      %48 = dma.hbm_to_vmem [thread:$0]  %s41, 256, %s43, [#allocation8], 128, 128, 8
    $region9: #{tpu_custom_call.1} parent=1 // pred_fallthru
      _
    // Predicated region
    $region10: #{tpu_custom_call.1} parent=1 // pred_check
      _
    $region11: #{tpu_custom_call.1} parent=1 // pred_check_branch
      %50 = sbr.rel (0) target = $region13
    $region12: #{tpu_custom_call.1} parent=1 // pred_region
      %51 = dma.done [#allocation5], 256
    $region13: #{tpu_custom_call.1} parent=1 // pred_fallthru
      _
    // Predicated region
    $region14: #{tpu_custom_call.1} parent=1 // pred_check
      _
    $region15: #{tpu_custom_call.1} parent=1 // pred_check_branch
      %53 = sbr.rel (0) target = $region17
    $region16: #{tpu_custom_call.1} parent=1 // pred_region
      %54 = dma.done [#allocation8], 256
    $region17: #{tpu_custom_call.1} parent=1 // pred_fallthru
      _
    %s55 = sadd.s32 0, 0
    %p56 = scmp.lt.s32.totalorder %s55, 0
    %s57 = scalar_select %p56, %s55, 0
    %s58 = smul.u32 2, %s57
    %s59 = sadd.s32 0, 0
    %p60 = scmp.lt.s32.totalorder %s59, 0
    %s61 = scalar_select %p60, %s59, 0
    %s62 = smul.u32 2, %s61
    %p63 = scmp.eq.s32.totalorder 0, 0
    // Predicated region
    $region18: #{tpu_custom_call.1} parent=1 // pred_check
      %p64 = pneg %p63
    $region19: #{tpu_custom_call.1} parent=1 // pred_check_branch
      %66 = sbr.rel (%p64) target = $region21
    $region20: #{tpu_custom_call.1} parent=1 // pred_region
      %67 = vst [vmem:[#allocation2] sm:$0xff] 0.0
      %68 = vst [vmem:[#allocation3] sm:$0xff] 0.0
    $region21: #{tpu_custom_call.1} parent=1 // pred_fallthru
      _
    %v69 = vld [vmem:[#allocation4] sm:$0xff]
    %v70 = vld [vmem:[#allocation4 + $0x8] sm:$0xff]
    %v71 = vld [vmem:[#allocation7] sm:$0xff]
    %v72 = vld [vmem:[#allocation7 + $0x8] sm:$0xff]
    %v73 = vmul.f32 %v69, 0.5
    %v74 = vmul.f32 %v70, 0.5
    %v75 = vtanh.pop %v73
    %v76 = vtanh.pop %v74
    %v77 = vmul.f32 %v75, 0.5
    %v78 = vmul.f32 %v76, 0.5
    %v79 = vadd.f32 %v77, 0.5
    %v80 = vadd.f32 %v78, 0.5
    %v81 = vmul.f32 %v79, %v71
    %v82 = vmul.f32 %v80, %v72
    %v83 = vadd.f32 %v79, %v71
    %v84 = vadd.f32 %v80, %v72
    %v85 = vadd.f32 %v81, %v82
    %v86 = vadd.f32 %v83, %v84
    %v87 = vadd.f32 %v85, 0.0
    %v88 = vadd.f32 %v86, 0.0
    %v89 = vld [vmem:[#allocation2] sm:$0xff]
    %v90 = vadd.f32 %v89, %v87
    %91 = vst [vmem:[#allocation2] sm:$0xff] %v90
    %v92 = vld [vmem:[#allocation3] sm:$0xff]
    %v93 = vadd.f32 %v92, %v88
    %94 = vst [vmem:[#allocation3] sm:$0xff] %v93
    // Predicated region
    $region22: #{tpu_custom_call.1} parent=1 // pred_check
      %p95 = pneg %p63
    $region23: #{tpu_custom_call.1} parent=1 // pred_check_branch
      %97 = sbr.rel (%p95) target = $region25
    $region24: #{tpu_custom_call.1} parent=1 // pred_region
      %v98 = vld [vmem:[#allocation2] sm:$0xff]
      %99 = vadd.xlane.f32.xlu0 %v98
      %v100 = vpop.xlane.xlu0 %99
      %v101 = vrot.slane %v100, 4
      %v102 = vadd.f32 %v100, %v101
      %v103 = vrot.slane %v102, 2
      %v104 = vadd.f32 %v102, %v103
      %v105 = vrot.slane %v104, 1
      %v106 = vadd.f32 %v104, %v105
      %s107 = vtos %v106
      %v108 = vstv %s107
      %vm109 = vcmask 0
      %110 = vst.msk [vmem:[#allocation9] sm:$0x1] %vm109, %v108
      %v111 = vld [vmem:[#allocation3] sm:$0xff]
      %112 = vadd.xlane.f32.xlu0 %v111
      %v113 = vpop.xlane.xlu0 %112
      %v114 = vrot.slane %v113, 4
      %v115 = vadd.f32 %v113, %v114
      %v116 = vrot.slane %v115, 2
      %v117 = vadd.f32 %v115, %v116
      %v118 = vrot.slane %v117, 1
      %v119 = vadd.f32 %v117, %v118
      %s120 = vtos %v119
      %v121 = vstv %s120
      %122 = vst.msk [vmem:[#allocation10] sm:$0x1] %vm109, %v121
    $region25: #{tpu_custom_call.1} parent=1 // pred_fallthru
      _
    // Predicated region
    $region26: #{tpu_custom_call.1} parent=1 // pred_check
      _
    $region27: #{tpu_custom_call.1} parent=1 // pred_check_branch
      %124 = sbr.rel (0) target = $region29
    $region28: #{tpu_custom_call.1} parent=1 // pred_region
      %s126 = ssub.s32 16, 16
      %127 = vsyncadd [#allocation6], %s126
      %s129 = sshll.u32 [#allocation9], 4
      %s130 = int_to_ptr.vmem [resolvable:$true] %s129
      %132 = dma.vmem_to_hbm [thread:$0]  %s130, 16, %s2, [#allocation6]
    $region29: #{tpu_custom_call.1} parent=1 // pred_fallthru
      _
    // Predicated region
    $region30: #{tpu_custom_call.1} parent=1 // pred_check
      _
    $region31: #{tpu_custom_call.1} parent=1 // pred_check_branch
      %134 = sbr.rel (0) target = $region33
    $region32: #{tpu_custom_call.1} parent=1 // pred_region
      %s136 = ssub.s32 16, 16
      %137 = vsyncadd [#allocation11], %s136
      %s139 = sshll.u32 [#allocation10], 4
      %s140 = int_to_ptr.vmem [resolvable:$true] %s139
      %142 = dma.vmem_to_hbm [thread:$0]  %s140, 16, %s3, [#allocation11]
    $region33: #{tpu_custom_call.1} parent=1 // pred_fallthru
      _
    // Predicated region
    $region34: #{tpu_custom_call.1} parent=1 // pred_check
      _
    $region35: #{tpu_custom_call.1} parent=1 // pred_check_branch
      %144 = sbr.rel (0) target = $region37
    $region36: #{tpu_custom_call.1} parent=1 // pred_region
      %145 = dma.done [#allocation6], 16
    $region37: #{tpu_custom_call.1} parent=1 // pred_fallthru
      _
    // Predicated region
    $region38: #{tpu_custom_call.1} parent=1 // pred_check
      _
    $region39: #{tpu_custom_call.1} parent=1 // pred_check_branch
      %147 = sbr.rel (0) target = $region41
    $region40: #{tpu_custom_call.1} parent=1 // pred_region
      %148 = dma.done [#allocation11], 16
    $region41: #{tpu_custom_call.1} parent=1 // pred_fallthru
      _
    %149 = vsyncpa [#allocation5], 1
    %150 = vsyncpa [#allocation8], 1
    %151 = vsyncpa [#allocation6], 1
    %152 = vsyncpa [#allocation11], 1

</llo_original>
